<compile_context>
chip_gen: v7x
topology: tpu7x:2x2x1
jax: 0.10.0
libtpu: 0.0.40
codegen_flags: <defaults>
</compile_context>

<pallas_src>
import functools

import jax
import jax.numpy as jnp
from jax.experimental import pallas as pl
from jax.experimental.pallas import tpu as pltpu


def _center_loss_kernel(lab_ref, x_ref, c_ref, out_ref, acc_ref, *,
                        num_classes, batch_size):
    """One grid step == one batch row.

    lab_ref : (B,)      int32 SMEM   scalar-prefetch labels (consumed by the
                                     centers index_map; unused in the body)
    x_ref   : (1, T, D) f32   VMEM   this row's segment features
    c_ref   : (1, 1, D) f32   VMEM   gathered center row centers[labels[i]]
    out_ref : (1, 1)    f32   SMEM   final loss (written at the last step)
    acc_ref : (1,)      f32   SMEM   running sum of clamped distances
    """
    del lab_ref  # only used by the BlockSpec index_maps
    i = pl.program_id(0)

    @pl.when(i == 0)
    def _init():
        acc_ref[0] = jnp.float32(0.0)
        out_ref[0, 0] = jnp.float32(0.0)

    x = x_ref[0].astype(jnp.float32)            # (T, D), lane-dense in D
    xm = jnp.mean(x, axis=0, keepdims=True)     # (1, D)  mean over time axis
    c = c_ref[0].astype(jnp.float32)            # (1, D)  gathered center row

    # Same expanded form as the PyTorch addmm_ path, restricted to the single
    # surviving (i, labels[i]) entry of the masked distance matrix:
    #     ||xm||^2 + ||c||^2 - 2 <xm, c>
    d = jnp.sum(xm * xm) + jnp.sum(c * c) - 2.0 * jnp.sum(xm * c)
    d = jnp.clip(d, 1e-12, 1e12)                # torch .clamp(1e-12, 1e12)

    acc_ref[0] = acc_ref[0] + d

    @pl.when(i == batch_size - 1)
    def _finalize():
        # PyTorch clamps AFTER masking, so every masked-out entry contributes
        # clamp(0) = 1e-12: add the analytic (C - 1) * 1e-12 per-row term.
        comp = jnp.float32((num_classes - 1) * 1e-12)
        out_ref[0, 0] = acc_ref[0] * jnp.float32(1.0 / batch_size) + comp


def center_loss(x, centers, labels):
    """x: (B, T, D), centers: (C, D), labels: (B,) int  ->  scalar f32 loss."""
    B, T, D = x.shape
    C, Dc = centers.shape
    assert D == Dc
    labels = labels.reshape(B).astype(jnp.int32)
    # (C, 1, D) view so the gathered (1, 1, D) block keeps the last two dims
    # equal to the full array dims (no (8, 128) block-shape issues).
    centers_r = centers.reshape(C, 1, D)

    kernel = functools.partial(
        _center_loss_kernel, num_classes=C, batch_size=B)

    out = pl.pallas_call(
        kernel,
        out_shape=jax.ShapeDtypeStruct((1, 1), jnp.float32),
        grid_spec=pltpu.PrefetchScalarGridSpec(
            num_scalar_prefetch=1,            # labels -> SMEM, feed index_maps
            grid=(B,),
            in_specs=[
                # x: one batch row per step (auto double-buffered by Pallas).
                pl.BlockSpec((1, T, D), lambda i, lab: (i, 0, 0)),
                # centers: data-dependent gather of row labels[i] only.
                pl.BlockSpec((1, 1, D), lambda i, lab: (lab[i], 0, 0)),
            ],
            out_specs=pl.BlockSpec((1, 1), lambda i, lab: (0, 0),
                                   memory_space=pltpu.SMEM),
            scratch_shapes=[pltpu.SMEM((1,), jnp.float32)],
        ),
        compiler_params=pltpu.CompilerParams(
            # The scalar accumulator carries across the batch axis, so it must
            # be "arbitrary".  (For v7x megacore one would instead emit
            # per-core partial sums and reduce them in the wrapper.)
            dimension_semantics=("arbitrary",),
        ),
    )(labels, x, centers_r)
    return out[0, 0]


if __name__ == "__main__":
    # Small shapes consistent with the module's forward:
    #   x: (batch=4, seq=8, feat_dim=32), num_classes=16
    B, T, D, C = 4, 8, 32, 16

    key = jax.random.PRNGKey(0)
    kx, kc, kl = jax.random.split(key, 3)

    x = jax.random.normal(kx, (B, T, D), dtype=jnp.float32)
    # Deterministic init of the module parameter: centers ~ randn(C, feat_dim)
    centers = jax.random.normal(kc, (C, D), dtype=jnp.float32)
    labels = jax.random.randint(kl, (B,), 0, C, dtype=jnp.int32)

    loss = center_loss(x, centers, labels)
    jax.block_until_ready(loss)

    # Pure-JAX reference check (same math as the PyTorch forward).
    xm = jnp.mean(x, axis=1)
    distmat = (
        jnp.sum(xm ** 2, axis=1, keepdims=True)
        + jnp.sum(centers ** 2, axis=1, keepdims=True).T
        - 2.0 * xm @ centers.T
    )
    mask = (labels[:, None] == jnp.arange(C)[None, :]).astype(jnp.float32)
    ref = jnp.sum(jnp.clip(distmat * mask, 1e-12, 1e12)) / B

    assert jnp.allclose(loss, ref, rtol=1e-5, atol=1e-5), (loss, ref)
    print("KERNEL_OK")
</pallas_src>

<mosaic_0001>
module attributes {stable_mosaic.version = 11 : i64} {
  func.func @_center_loss_kernel(%arg0: i32, %arg1: memref<4xi32, #tpu.memory_space<smem>>, %arg2: memref<1x8x32xf32, #tpu.memory_space<vmem>>, %arg3: memref<1x1x32xf32, #tpu.memory_space<vmem>>, %arg4: memref<1x1xf32, #tpu.memory_space<smem>>, %arg5: memref<1xf32, #tpu.memory_space<smem>>) attributes {dimension_semantics = [#tpu.dimension_semantics<arbitrary>], iteration_bounds = array<i64: 4>, scalar_prefetch = 1 : i64, scratch_operands = 1 : i64, tpu.core_type = #tpu.core_type<tc>, window_params = [{transform_indices = @transform_0, window_bounds = array<i64: 1, 8, 32>}, {transform_indices = @transform_1, window_bounds = array<i64: 1, 1, 32>}, {transform_indices = @transform_2, window_bounds = array<i64: 1, 1>}]} {
    %c0_i32 = arith.constant 0 : i32
    %0 = arith.cmpi eq, %arg0, %c0_i32 : i32
    %1 = arith.extui %0 : i1 to i32
    %c0_i32_0 = arith.constant 0 : i32
    %2 = arith.cmpi ne, %1, %c0_i32_0 : i32
    scf.if %2 {
      %cst_16 = arith.constant 0.000000e+00 : f32
      %c0_17 = arith.constant 0 : index
      %37 = memref.load %arg5[%c0_17] : memref<1xf32, #tpu.memory_space<smem>>
      memref.store %cst_16, %arg5[%c0_17] : memref<1xf32, #tpu.memory_space<smem>>
      %cst_18 = arith.constant 0.000000e+00 : f32
      %c0_19 = arith.constant 0 : index
      %c0_20 = arith.constant 0 : index
      %38 = memref.load %arg4[%c0_19, %c0_20] : memref<1x1xf32, #tpu.memory_space<smem>>
      memref.store %cst_18, %arg4[%c0_19, %c0_20] : memref<1x1xf32, #tpu.memory_space<smem>>
    } else {
    }
    %c0 = arith.constant 0 : index
    %c0_1 = arith.constant 0 : index
    %c0_2 = arith.constant 0 : index
    %3 = vector.load %arg2[%c0, %c0_1, %c0_2] : memref<1x8x32xf32, #tpu.memory_space<vmem>>, vector<1x8x32xf32>
    %4 = vector.shape_cast %3 : vector<1x8x32xf32> to vector<8x32xf32>
    %cst = arith.constant dense<0.000000e+00> : vector<32xf32>
    %5 = vector.multi_reduction <add>, %4, %cst [0] : vector<8x32xf32> to vector<32xf32>
    %6 = vector.shape_cast %5 : vector<32xf32> to vector<1x32xf32>
    %cst_3 = arith.constant 8.000000e+00 : f32
    %7 = vector.broadcast %cst_3 : f32 to vector<1x32xf32>
    %8 = arith.divf %6, %7 : vector<1x32xf32>
    %c0_4 = arith.constant 0 : index
    %c0_5 = arith.constant 0 : index
    %c0_6 = arith.constant 0 : index
    %9 = vector.load %arg3[%c0_4, %c0_5, %c0_6] : memref<1x1x32xf32, #tpu.memory_space<vmem>>, vector<1x1x32xf32>
    %10 = vector.shape_cast %9 : vector<1x1x32xf32> to vector<1x32xf32>
    %11 = arith.mulf %8, %8 : vector<1x32xf32>
    %12 = vector.shape_cast %11 : vector<1x32xf32> to vector<1x1x32xf32>
    %cst_7 = arith.constant dense<0.000000e+00> : vector<1xf32>
    %13 = vector.multi_reduction <add>, %12, %cst_7 [1, 2] : vector<1x1x32xf32> to vector<1xf32>
    %14 = vector.shape_cast %13 : vector<1xf32> to vector<1x1x1xf32>
    %15 = vector.extract %14[0, 0, 0] : f32 from vector<1x1x1xf32>
    %16 = arith.mulf %10, %10 : vector<1x32xf32>
    %17 = vector.shape_cast %16 : vector<1x32xf32> to vector<1x1x32xf32>
    %cst_8 = arith.constant dense<0.000000e+00> : vector<1xf32>
    %18 = vector.multi_reduction <add>, %17, %cst_8 [1, 2] : vector<1x1x32xf32> to vector<1xf32>
    %19 = vector.shape_cast %18 : vector<1xf32> to vector<1x1x1xf32>
    %20 = vector.extract %19[0, 0, 0] : f32 from vector<1x1x1xf32>
    %21 = arith.addf %15, %20 : f32
    %22 = arith.mulf %8, %10 : vector<1x32xf32>
    %23 = vector.shape_cast %22 : vector<1x32xf32> to vector<1x1x32xf32>
    %cst_9 = arith.constant dense<0.000000e+00> : vector<1xf32>
    %24 = vector.multi_reduction <add>, %23, %cst_9 [1, 2] : vector<1x1x32xf32> to vector<1xf32>
    %25 = vector.shape_cast %24 : vector<1xf32> to vector<1x1x1xf32>
    %26 = vector.extract %25[0, 0, 0] : f32 from vector<1x1x1xf32>
    %cst_10 = arith.constant 2.000000e+00 : f32
    %27 = arith.mulf %cst_10, %26 : f32
    %28 = arith.subf %21, %27 : f32
    %cst_11 = arith.constant 9.99999996E-13 : f32
    %cst_12 = arith.constant 9.99999995E+11 : f32
    %29 = arith.maximumf %cst_11, %28 : f32
    %30 = arith.minimumf %cst_12, %29 : f32
    %c0_13 = arith.constant 0 : index
    %31 = memref.load %arg5[%c0_13] : memref<1xf32, #tpu.memory_space<smem>>
    %32 = arith.addf %31, %30 : f32
    %c0_14 = arith.constant 0 : index
    %33 = memref.load %arg5[%c0_14] : memref<1xf32, #tpu.memory_space<smem>>
    memref.store %32, %arg5[%c0_14] : memref<1xf32, #tpu.memory_space<smem>>
    %c3_i32 = arith.constant 3 : i32
    %34 = arith.cmpi eq, %arg0, %c3_i32 : i32
    %35 = arith.extui %34 : i1 to i32
    %c0_i32_15 = arith.constant 0 : i32
    %36 = arith.cmpi ne, %35, %c0_i32_15 : i32
    scf.if %36 {
      %c0_16 = arith.constant 0 : index
      %37 = memref.load %arg5[%c0_16] : memref<1xf32, #tpu.memory_space<smem>>
      %cst_17 = arith.constant 2.500000e-01 : f32
      %38 = arith.mulf %37, %cst_17 : f32
      %cst_18 = arith.constant 1.500000e-11 : f32
      %39 = arith.addf %38, %cst_18 : f32
      %c0_19 = arith.constant 0 : index
      %c0_20 = arith.constant 0 : index
      %40 = memref.load %arg4[%c0_19, %c0_20] : memref<1x1xf32, #tpu.memory_space<smem>>
      memref.store %39, %arg4[%c0_19, %c0_20] : memref<1x1xf32, #tpu.memory_space<smem>>
    } else {
    }
    return
  }
  func.func @transform_0(%arg0: i32, %arg1: memref<4xi32, #tpu.memory_space<smem>>) -> (i32, i32, i32) {
    %c0_i32 = arith.constant 0 : i32
    %c0_i32_0 = arith.constant 0 : i32
    %c0_i32_1 = arith.constant 0 : i32
    return %arg0, %c0_i32, %c0_i32_0 : i32, i32, i32
  }
  func.func @transform_1(%arg0: i32, %arg1: memref<4xi32, #tpu.memory_space<smem>>) -> (i32, i32, i32) {
    %0 = arith.index_cast %arg0 : i32 to index
    %1 = memref.load %arg1[%0] : memref<4xi32, #tpu.memory_space<smem>>
    %c0_i32 = arith.constant 0 : i32
    %c0_i32_0 = arith.constant 0 : i32
    %c0_i32_1 = arith.constant 0 : i32
    return %1, %c0_i32, %c0_i32_0 : i32, i32, i32
  }
  func.func @transform_2(%arg0: i32, %arg1: memref<4xi32, #tpu.memory_space<smem>>) -> (i32, i32) {
    %c0_i32 = arith.constant 0 : i32
    %c0_i32_0 = arith.constant 0 : i32
    %c0_i32_1 = arith.constant 0 : i32
    return %c0_i32, %c0_i32_0 : i32, i32
  }
}

</mosaic_0001>

<llo_original>
// kernel: tpu_custom_call.1
$region0: #{tpu_custom_call.1}
  #allocation0 [shape = 'u32[]', space=smem, size = 0x4, offset = 0x4, fixed_abs, tag = 'smem constant byte address 0x4 - core index']
  #allocation1 [shape = 'u32[144,128]{1,0:T(1,128)}', space=vmem, size = 0x12000, scoped, tag = 'internal scratch']
  #allocation2 [shape = 'f32[1]{0:T(128)}', space=smem, size = 0x200, scoped, tag = 'scratch operand']
  #allocation3 [shape = 's32[1]{0}', space=sflag, size = 0x4, scoped, tag = 'scoped memory for tpu_custom_call.1']
  #allocation4 [shape = 'u8[512]{0}', space=smem, size = 0x200, scoped, tag = 'prefetched SMEM operand 0']
  %s0 = inlined_call_operand.hbm [shape: s32[4], index: 0, kind: input, shape index: {}]
  %s1 = inlined_call_operand.hbm [shape: f32[4,8,32], index: 1, kind: input, shape index: {}]
  %s2 = inlined_call_operand.hbm [shape: f32[16,1,32], index: 2, kind: input, shape index: {}]
  %s3 = inlined_call_operand.hbm [shape: f32[1,1], index: 3, kind: output, shape index: {}]
  %s4 = sld [smem:[#allocation0]]
  $region57: #{tpu_custom_call.1} parent=0
    _
  %s6 = ssub.s32 1, %s4
  %s7 = scalar_select 0, %s6, %s4
  %9 = dma.hbm_to_smem %s0, 16, [#allocation4], [#allocation3]
  %10 = dma.done [#allocation3], 16
  %11 = sfence
  $region1: #{tpu_custom_call.1} parent=0
    #allocation5 [shape = 'u8[8192]{0}', space=vmem, size = 0x2000, scoped, tag = 'input window, operand 1']
    #allocation6 [shape = 's32[2]{0}', space=sflag, size = 0x8, scoped, tag = 'scoped memory for tpu_custom_call.1']
    #allocation7 [shape = 's32[2]{0}', space=sflag, size = 0x8, scoped, tag = 'scoped memory for tpu_custom_call.1']
    #allocation8 [shape = 'u8[1024]{0}', space=vmem, size = 0x400, scoped, tag = 'input window, operand 2']
    #allocation9 [shape = 's32[2]{0}', space=sflag, size = 0x8, scoped, tag = 'scoped memory for tpu_custom_call.1']
    #allocation10 [shape = 'u8[512]{0}', space=smem, size = 0x200, scoped, tag = 'output window, operand 0, single buffered']
    %12 = vsyncpa [#allocation6], 0
    %s13 = scalar_lea.sflag [#allocation6], 1
    %14 = vsyncpa %s13, 0
    %15 = vsyncpa [#allocation9], 0
    %s16 = scalar_lea.sflag [#allocation9], 1
    %17 = vsyncpa %s16, 0
    %18 = vsyncpa [#allocation7], 0
    loop: start=0, step=1, limit=6
    $region2: #{tpu_custom_call.1} parent=1 // loop_pre_header
      _
    $region3: #{tpu_custom_call.1} parent=1 // loop_header
      %s20 = sphi 0, %s24
      %p21 = scmp.ge.s32.totalorder %s20, 6
      %s30 = sphi 0, %s32
      %s33 = sphi 0, %s30
      %s34 = sphi 0, %s33
      %s50 = sphi 0, %s34
      %s58 = sphi 0, %s60
      %s61 = sphi 0, %s58
      %s62 = sphi 0, %s61
      %s78 = sphi 0, %s62
      %s82 = sphi 0, %s82
      %s84 = sphi 0, %s82
      %s85 = sphi 0, %s84
      %s99 = sphi 0, %s85
    $region4: #{tpu_custom_call.1} parent=1 // loop_header_branch
      %23 = sbr.rel (%p21) target = $region8
    $region5: #{tpu_custom_call.1} parent=1 // loop_body
      %s25 = ssub.s32 %s20, 1
      %s26 = ssub.s32 %s20, 2
      %s27 = sadd.s32 %s20, 1
      %s28 = ssub.s32 %s20, %s27
      %p29 = scmp.eq.s32.totalorder %s28, 0
      %s31 = sadd.s32 %s30, 1
      %s32 = scalar_select %p29, %s30, %s31
      %p35 = pneg %p29
      %p36 = scmp.eq.s32.totalorder %s20, 3
      %p37 = por %p35, %p36
      %p38 = scmp.ne.s32.totalorder %s30, %s33
      %p39 = scmp.eq.s32.totalorder %s20, 0
      %p40 = por %p38, %p39
      %p41 = scmp.ne.s32.totalorder %s30, %s33
      %p42 = scmp.eq.s32.totalorder %s25, 3
      %p43 = por %p41, %p42
      %p44 = scmp.ne.s32.totalorder %s33, %s34
      %p45 = scmp.eq.s32.totalorder %s25, 0
      %p46 = por %p44, %p45
      %p47 = scmp.ne.s32.totalorder %s33, %s34
      %p48 = scmp.eq.s32.totalorder %s26, 3
      %p49 = por %p47, %p48
      %p51 = scmp.ne.s32.totalorder %s34, %s50
      %p52 = scmp.eq.s32.totalorder %s26, 0
      %p53 = por %p51, %p52
      %s54 = sld [smem:[#allocation4 + %s20]]
      %s55 = sld [smem:[#allocation4 + %s27]]
      %s56 = ssub.s32 %s54, %s55
      %p57 = scmp.eq.s32.totalorder %s56, 0
      %s59 = sadd.s32 %s58, 1
      %s60 = scalar_select %p57, %s58, %s59
      %p63 = pneg %p57
      %p64 = scmp.eq.s32.totalorder %s20, 3
      %p65 = por %p63, %p64
      %p66 = scmp.ne.s32.totalorder %s58, %s61
      %p67 = scmp.eq.s32.totalorder %s20, 0
      %p68 = por %p66, %p67
      %p69 = scmp.ne.s32.totalorder %s58, %s61
      %p70 = scmp.eq.s32.totalorder %s25, 3
      %p71 = por %p69, %p70
      %p72 = scmp.ne.s32.totalorder %s61, %s62
      %p73 = scmp.eq.s32.totalorder %s25, 0
      %p74 = por %p72, %p73
      %p75 = scmp.ne.s32.totalorder %s61, %s62
      %p76 = scmp.eq.s32.totalorder %s26, 3
      %p77 = por %p75, %p76
      %p79 = scmp.ne.s32.totalorder %s62, %s78
      %p80 = scmp.eq.s32.totalorder %s26, 0
      %p81 = por %p79, %p80
      %s83 = sadd.s32 %s82, 1
      %p86 = scmp.eq.s32.totalorder %s20, 3
      %p87 = scmp.ne.s32.totalorder %s82, %s84
      %p88 = scmp.eq.s32.totalorder %s20, 0
      %p89 = por %p87, %p88
      %p90 = scmp.ne.s32.totalorder %s82, %s84
      %p91 = scmp.eq.s32.totalorder %s25, 3
      %p92 = por %p90, %p91
      %p93 = scmp.ne.s32.totalorder %s84, %s85
      %p94 = scmp.eq.s32.totalorder %s25, 0
      %p95 = por %p93, %p94
      %p96 = scmp.ne.s32.totalorder %s84, %s85
      %p97 = scmp.eq.s32.totalorder %s26, 3
      %p98 = por %p96, %p97
      %p100 = scmp.ne.s32.totalorder %s85, %s99
      %p101 = scmp.eq.s32.totalorder %s26, 0
      %p102 = por %p100, %p101
      %p103 = scmp.le.s32.totalorder 1, %s20
      %p104 = scmp.lt.s32.totalorder %s20, 5
      %p105 = pnand %p103, %p104
      %p106 = pneg %p105
      // Predicated region
      $region9: #{tpu_custom_call.1} parent=5 // pred_check
        _
      $region10: #{tpu_custom_call.1} parent=5 // pred_check_branch
        %108 = sbr.rel (%p105) target = $region12
      $region11: #{tpu_custom_call.1} parent=5 // pred_region
        %s109 = ssub.s32 %s20, 1
      $region12: #{tpu_custom_call.1} parent=5 // pred_fallthru
        _
      %p110 = scmp.lt.s32.totalorder %s20, 4
      // Predicated region
      $region13: #{tpu_custom_call.1} parent=5 // pred_check
        %p111 = pneg %p110
      $region14: #{tpu_custom_call.1} parent=5 // pred_check_branch
        %113 = sbr.rel (%p111) target = $region16
      $region15: #{tpu_custom_call.1} parent=5 // pred_region
        // Predicated region
        $region17: #{tpu_custom_call.1} parent=15 // pred_check
          %p114 = pneg %p40
        $region18: #{tpu_custom_call.1} parent=15 // pred_check_branch
          %116 = sbr.rel (%p114) target = $region20
        $region19: #{tpu_custom_call.1} parent=15 // pred_region
          %s117 = sand.u32 %s30, 1
          %s118 = scalar_lea.sflag [#allocation6], %s117
          %s119 = sand.u32 %s30, 1
          %s120 = smul.addr %s119, 8
          %s121 = scalar_lea.vmem [#allocation5], %s120
          %s123 = ssub.s32 128, 128
          %124 = vsyncadd %s118, %s123
          %s125 = smul.addr %s20, 128
          %s126 = scalar_lea.hbm %s1, %s125
          %s128 = sshll.u32 %s121, 4
          %s129 = int_to_ptr.vmem [resolvable:$true] %s128
          %131 = dma.hbm_to_vmem [thread:$0]  %s126, 128, %s129, %s118
        $region20: #{tpu_custom_call.1} parent=15 // pred_fallthru
          _
        // Predicated region
        $region21: #{tpu_custom_call.1} parent=15 // pred_check
          %p132 = pneg %p68
        $region22: #{tpu_custom_call.1} parent=15 // pred_check_branch
          %134 = sbr.rel (%p132) target = $region24
        $region23: #{tpu_custom_call.1} parent=15 // pred_region
          %s135 = sand.u32 %s58, 1
          %s136 = scalar_lea.sflag [#allocation9], %s135
          %s137 = sand.u32 %s58, 1
          %s138 = scalar_lea.vmem [#allocation8], %s137
          %s139 = sld [smem:[#allocation4 + %s20]]
          %s141 = ssub.s32 16, 16
          %142 = vsyncadd %s136, %s141
          %s143 = smul.addr %s139, 16
          %s144 = scalar_lea.hbm %s2, %s143
          %s146 = sshll.u32 %s138, 4
          %s147 = int_to_ptr.vmem [resolvable:$true] %s146
          %149 = dma.hbm_to_vmem [thread:$0]  %s144, 16, %s147, %s136
        $region24: #{tpu_custom_call.1} parent=15 // pred_fallthru
          _
      $region16: #{tpu_custom_call.1} parent=5 // pred_fallthru
        _
      %p150 = scmp.le.s32.totalorder 1, %s20
      %p151 = scmp.lt.s32.totalorder %s20, 5
      %p152 = pnand %p150, %p151
      %p153 = pneg %p152
      // Predicated region
      $region25: #{tpu_custom_call.1} parent=5 // pred_check
        _
      $region26: #{tpu_custom_call.1} parent=5 // pred_check_branch
        %155 = sbr.rel (%p152) target = $region28
      $region27: #{tpu_custom_call.1} parent=5 // pred_region
        %s156 = ssub.s32 %s20, 1
        %s157 = sand.u32 %s33, 1
        %s158 = scalar_lea.sflag [#allocation6], %s157
        %s159 = sand.u32 %s33, 1
        %s160 = smul.addr %s159, 8
        %s161 = scalar_lea.vmem [#allocation5], %s160
        // Predicated region
        $region29: #{tpu_custom_call.1} parent=27 // pred_check
          %p162 = pneg %p46
        $region30: #{tpu_custom_call.1} parent=27 // pred_check_branch
          %164 = sbr.rel (%p162) target = $region32
        $region31: #{tpu_custom_call.1} parent=27 // pred_region
          %165 = dma.done %s158, 128
        $region32: #{tpu_custom_call.1} parent=27 // pred_fallthru
          _
        %s166 = sand.u32 %s61, 1
        %s167 = scalar_lea.sflag [#allocation9], %s166
        %s168 = sand.u32 %s61, 1
        %s169 = scalar_lea.vmem [#allocation8], %s168
        // Predicated region
        $region33: #{tpu_custom_call.1} parent=27 // pred_check
          %p170 = pneg %p74
        $region34: #{tpu_custom_call.1} parent=27 // pred_check_branch
          %172 = sbr.rel (%p170) target = $region36
        $region35: #{tpu_custom_call.1} parent=27 // pred_region
          %173 = dma.done %s167, 16
        $region36: #{tpu_custom_call.1} parent=27 // pred_fallthru
          _
        %s174 = sand.u32 %s33, 1
        %s175 = scalar_lea.sflag [#allocation6], %s174
        %s176 = sand.u32 %s33, 1
        %s177 = smul.addr %s176, 8
        %s178 = scalar_lea.vmem [#allocation5], %s177
        %p179 = pneg %p46
        %p180 = pneg %p43
        %s181 = sand.u32 %s61, 1
        %s182 = scalar_lea.sflag [#allocation9], %s181
        %s183 = sand.u32 %s61, 1
        %s184 = scalar_lea.vmem [#allocation8], %s183
        %p185 = pneg %p74
        %p186 = pneg %p71
        %p187 = pneg %p95
        %p188 = pneg %p92
        %s189 = sld [smem:[#allocation4 + %s25]]
        %p190 = scmp.eq.s32.totalorder %s25, 0
        // Predicated region
        $region37: #{tpu_custom_call.1} parent=27 // pred_check
          %p191 = pneg %p190
        $region38: #{tpu_custom_call.1} parent=27 // pred_check_branch
          %193 = sbr.rel (%p191) target = $region40
        $region39: #{tpu_custom_call.1} parent=27 // pred_region
          %s194 = scalar_lea.smem [#allocation2], 0
          %195 = sst [smem:[%s194]] 0.0
          %s196 = scalar_lea.smem [#allocation10], 0
          %197 = sst [smem:[%s196]] 0.0
        $region40: #{tpu_custom_call.1} parent=27 // pred_fallthru
          _
        %v198 = vld [vmem:[%s161] sm:$0xff]
        %vm199 = vcmask 261120
        %v200 = vsel %vm199, %v198, 0.0
        %v201 = vrot.slane %v200, 4
        %v202 = vadd.f32 %v200, %v201
        %v203 = vrot.slane %v202, 2
        %v204 = vadd.f32 %v202, %v203
        %v205 = vrot.slane %v204, 1
        %v206 = vadd.f32 %v204, %v205
        %v207 = vrcp.pop 8.0
        %v208 = vmul.f32 %v206, %v207
        %v209 = vld [vmem:[%s169] sm:$0x1]
        %v210 = vmul.f32 %v208, %v208
        %vm211 = vcmask 253952
        %v212 = vsel %vm211, %v210, 0.0
        %213 = vadd.xlane.f32.xlu0 %v212
        %v214 = vpop.xlane.xlu0 %213
        %v215 = vrot.slane %v214, 4
        %v216 = vadd.f32 %v214, %v215
        %v217 = vrot.slane %v216, 2
        %v218 = vadd.f32 %v216, %v217
        %v219 = vrot.slane %v218, 1
        %v220 = vadd.f32 %v218, %v219
        %s221 = vtos %v220
        %v222 = vmul.f32 %v209, %v209
        %v223 = vsel %vm211, %v222, 0.0
        %224 = vadd.xlane.f32.xlu0 %v223
        %v225 = vpop.xlane.xlu0 %224
        %v226 = vrot.slane %v225, 4
        %v227 = vadd.f32 %v225, %v226
        %v228 = vrot.slane %v227, 2
        %v229 = vadd.f32 %v227, %v228
        %v230 = vrot.slane %v229, 1
        %v231 = vadd.f32 %v229, %v230
        %s232 = vtos %v231
        %s233 = sadd.f32 %s221, %s232
        %v234 = vmul.f32 %v208, %v209
        %v235 = vsel %vm211, %v234, 0.0
        %236 = vadd.xlane.f32.xlu0 %v235
        %v237 = vpop.xlane.xlu0 %236
        %v238 = vrot.slane %v237, 4
        %v239 = vadd.f32 %v237, %v238
        %v240 = vrot.slane %v239, 2
        %v241 = vadd.f32 %v239, %v240
        %v242 = vrot.slane %v241, 1
        %v243 = vadd.f32 %v241, %v242
        %s244 = vtos %v243
        %s245 = smul.f32 %s244, 2.0
        %s246 = ssub.f32 %s233, %s245
        %s247 = smax.f32 %s246, 1e-12
        %s248 = smin.f32 %s247, 1e+12
        %s249 = sld [smem:[#allocation2]]
        %s250 = sadd.f32 %s249, %s248
        %s251 = scalar_lea.smem [#allocation2], 0
        %252 = sst [smem:[%s251]] %s250
        %p253 = scmp.eq.s32.totalorder %s25, 3
        // Predicated region
        $region41: #{tpu_custom_call.1} parent=27 // pred_check
          %p254 = pneg %p253
        $region42: #{tpu_custom_call.1} parent=27 // pred_check_branch
          %256 = sbr.rel (%p254) target = $region44
        $region43: #{tpu_custom_call.1} parent=27 // pred_region
          %s257 = sld [smem:[#allocation2]]
          %s258 = smul.f32 %s257, 0.25
          %s259 = sadd.f32 %s258, 1.5e-11
          %s260 = scalar_lea.smem [#allocation10], 0
          %261 = sst [smem:[%s260]] %s259
        $region44: #{tpu_custom_call.1} parent=27 // pred_fallthru
          _
        // Predicated region
        $region45: #{tpu_custom_call.1} parent=27 // pred_check
          %p262 = pneg %p92
        $region46: #{tpu_custom_call.1} parent=27 // pred_check_branch
          %264 = sbr.rel (%p262) target = $region48
        $region47: #{tpu_custom_call.1} parent=27 // pred_region
          %s266 = ssub.s32 16, 16
          %267 = vsyncadd [#allocation7], %s266
          %270 = dma.smem_to_hbm [#allocation10], 16, %s3, [#allocation7]
        $region48: #{tpu_custom_call.1} parent=27 // pred_fallthru
          _
        // Predicated region
        $region49: #{tpu_custom_call.1} parent=27 // pred_check
          %p271 = pneg %p92
        $region50: #{tpu_custom_call.1} parent=27 // pred_check_branch
          %273 = sbr.rel (%p271) target = $region52
        $region51: #{tpu_custom_call.1} parent=27 // pred_region
          %274 = dma.done [#allocation7], 16
        $region52: #{tpu_custom_call.1} parent=27 // pred_fallthru
          _
        %275 = sfence
      $region28: #{tpu_custom_call.1} parent=5 // pred_fallthru
        _
      %p276 = scmp.le.s32.totalorder 2, %s20
      // Predicated region
      $region53: #{tpu_custom_call.1} parent=5 // pred_check
        %p277 = pneg %p276
      $region54: #{tpu_custom_call.1} parent=5 // pred_check_branch
        %279 = sbr.rel (%p277) target = $region56
      $region55: #{tpu_custom_call.1} parent=5 // pred_region
        %s280 = ssub.s32 %s20, 2
      $region56: #{tpu_custom_call.1} parent=5 // pred_fallthru
        _
    $region6: #{tpu_custom_call.1} parent=1 // loop_footer
      %s24 = sadd.s32 1, %s20
    $region7: #{tpu_custom_call.1} parent=1 // loop_footer_branch
      %19 = sbr.rel target = $region3
    $region8: #{tpu_custom_call.1} parent=1 // loop_exit
      _
    %281 = vsyncpa [#allocation6], 1
    %s282 = scalar_lea.sflag [#allocation6], 1
    %283 = vsyncpa %s282, 1
    %284 = vsyncpa [#allocation9], 1
    %s285 = scalar_lea.sflag [#allocation9], 1
    %286 = vsyncpa %s285, 1
    %287 = vsyncpa [#allocation7], 1
    %s288 = scalar_lea.sflag [#allocation7], 1
    %289 = vsyncpa %s288, 1

</llo_original>
